<compile_context>
chip_gen: v6e
topology: v6e:2x2x1
jax: 0.10.0
libtpu: 0.0.40
codegen_flags: <defaults>
</compile_context>

<pallas_src>
import functools

import jax
import jax.numpy as jnp
from jax.experimental import pallas as pl
from jax.experimental.pallas import tpu as pltpu

LANE = 128
SUBLANE = 8
D_IN = 1000          # Linear(1000, 128) input features


def _round_up(x, m):
    return (x + m - 1) // m * m


# ---------------------------------------------------------------------------
# Kernel: one batch tile through the (tail-folded) 2-dot affine chain.
#   x:(tm,1000)  W1:(1000,128)  b1:(1,128)  Wc:(128,c_pad)  bc:(1,c_pad)
# ---------------------------------------------------------------------------
def _mlp_resnet_kernel(x_ref, w1_ref, b1_ref, wc_ref, bc_ref, o_ref):
    h = jnp.dot(x_ref[...], w1_ref[...],
                preferred_element_type=jnp.float32) + b1_ref[...]
    o = jnp.dot(h, wc_ref[...],
                preferred_element_type=jnp.float32) + bc_ref[...]
    o_ref[...] = o.astype(o_ref.dtype)


# ---------------------------------------------------------------------------
# One-time parameter packing (outside the hot path).
# params hold PyTorch-style Linear weights: w_i is (out_features, in_features).
# ---------------------------------------------------------------------------
def pack_params(params):
    hp = jax.lax.Precision.HIGHEST
    f32 = jnp.float32

    w1 = params["w1"].T.astype(f32)                       # (1000, 128)
    b1 = params["b1"].reshape(1, -1).astype(f32)          # (1, 128)

    w2 = params["w2"].T.astype(f32)                       # (128, 64)
    w3 = params["w3"].T.astype(f32)                       # (64, 16)
    w4 = params["w4"].T.astype(f32)                       # (16, num_class)
    b2 = params["b2"].reshape(1, -1).astype(f32)
    b3 = params["b3"].reshape(1, -1).astype(f32)
    b4 = params["b4"].reshape(1, -1).astype(f32)

    # Fold the activation-free tail: h1 @ Wc + bc == ((h1@W2+b2)@W3+b3)@W4+b4.
    wc = jnp.dot(jnp.dot(w2, w3, precision=hp), w4, precision=hp)   # (128, c)
    bc = jnp.dot(jnp.dot(b2, w3, precision=hp) + b3, w4, precision=hp) + b4

    num_class = w4.shape[1]
    c_pad = _round_up(num_class, LANE)
    wc = jnp.pad(wc, ((0, 0), (0, c_pad - num_class)))    # lane-dense output
    bc = jnp.pad(bc, ((0, 0), (0, c_pad - num_class)))

    return {"w1": w1, "b1": b1, "wc": wc, "bc": bc}


# ---------------------------------------------------------------------------
# Jitted forward: a single pallas_call over a parallel batch grid.
# ---------------------------------------------------------------------------
@functools.partial(jax.jit, static_argnames=("num_class", "block_m"))
def mlp_resnet_forward(embed, packed, *, num_class, block_m=512):
    n, d_in = embed.shape
    w1, b1, wc, bc = packed["w1"], packed["b1"], packed["wc"], packed["bc"]
    h1 = w1.shape[1]
    c_pad = wc.shape[1]

    # Batch tile: fold small batches into one block; cap at block_m otherwise.
    tm = min(block_m, _round_up(n, SUBLANE))
    grid_m = pl.cdiv(n, tm)

    const = lambda i: (0, 0)      # weights/biases resident across grid steps

    cost = pl.CostEstimate(
        flops=2 * n * (d_in * h1 + h1 * c_pad),
        transcendentals=0,
        bytes_accessed=4 * (n * d_in + n * c_pad
                            + d_in * h1 + h1 * c_pad + h1 + c_pad),
    )

    out_p = pl.pallas_call(
        _mlp_resnet_kernel,
        out_shape=jax.ShapeDtypeStruct((n, c_pad), jnp.float32),
        grid=(grid_m,),
        in_specs=[
            pl.BlockSpec((tm, d_in), lambda i: (i, 0)),   # x tile (full K)
            pl.BlockSpec((d_in, h1), const),              # W1
            pl.BlockSpec((1, h1), const),                 # b1
            pl.BlockSpec((h1, c_pad), const),             # Wc (folded tail)
            pl.BlockSpec((1, c_pad), const),              # bc
        ],
        out_specs=pl.BlockSpec((tm, c_pad), lambda i: (i, 0)),
        compiler_params=pltpu.CompilerParams(
            dimension_semantics=("parallel",)),
        cost_estimate=cost,
    )(embed.astype(jnp.float32), w1, b1, wc, bc)

    return out_p[:, :num_class]


# ---------------------------------------------------------------------------
# Test harness.
# ---------------------------------------------------------------------------
def init_params(key, num_class):
    """PyTorch-style Linear params: w is (out_features, in_features)."""
    dims = [D_IN, 128, 64, 16, num_class]
    keys = jax.random.split(key, 8)
    params = {}
    for i in range(4):
        fin, fout = dims[i], dims[i + 1]
        scale = 1.0 / jnp.sqrt(jnp.float32(fin))
        params[f"w{i + 1}"] = scale * jax.random.normal(
            keys[2 * i], (fout, fin), jnp.float32)
        params[f"b{i + 1}"] = scale * jax.random.normal(
            keys[2 * i + 1], (fout,), jnp.float32)
    return params


def reference_forward(embed, params):
    # Layer-by-layer, full-f32 precision: faithful to the PyTorch f32 module.
    hp = jax.lax.Precision.HIGHEST
    h = embed
    for i in range(1, 5):
        h = jnp.dot(h, params[f"w{i}"].T, precision=hp) + params[f"b{i}"]
    return h


if __name__ == "__main__":
    key = jax.random.PRNGKey(0)
    N, NUM_CLASS = 4, 10

    kx, kp = jax.random.split(key)
    x = jax.random.normal(kx, (N, D_IN), jnp.float32)     # embed
    params = init_params(kp, NUM_CLASS)
    packed = pack_params(params)                          # one-time packing

    out = mlp_resnet_forward(x, packed, num_class=NUM_CLASS)
    out = jax.block_until_ready(out)
    assert out.shape == (N, NUM_CLASS), out.shape

    ref = reference_forward(x, params)
    # Kernel dots run at the MXU's default (bf16-pass) precision and the tail
    # layers are algebraically folded, so rounding is reassociated vs the
    # full-f32 layer-by-layer reference -> allow a few-1e-3 deviation.
    err = float(jnp.max(jnp.abs(out - ref)))
    assert jnp.allclose(out, ref, atol=2e-2, rtol=2e-2), err
    print("KERNEL_OK")
</pallas_src>

<mosaic_0001>
module attributes {stable_mosaic.version = 11 : i64} {
  func.func @_mlp_resnet_kernel(%arg0: i32, %arg1: memref<8x1000xf32, #tpu.memory_space<vmem>>, %arg2: memref<1000x128xf32, #tpu.memory_space<vmem>>, %arg3: memref<1x128xf32, #tpu.memory_space<vmem>>, %arg4: memref<128x128xf32, #tpu.memory_space<vmem>>, %arg5: memref<1x128xf32, #tpu.memory_space<vmem>>, %arg6: memref<8x128xf32, #tpu.memory_space<vmem>>) attributes {dimension_semantics = [#tpu.dimension_semantics<parallel>], iteration_bounds = array<i64: 1>, scalar_prefetch = 0 : i64, scratch_operands = 0 : i64, tpu.core_type = #tpu.core_type<tc>, window_params = [{transform_indices = @transform_0, window_bounds = array<i64: 8, 1000>}, {pipeline_mode = #tpu.pipeline_mode<synchronous>, transform_indices = @transform_1, window_bounds = array<i64: 1000, 128>}, {pipeline_mode = #tpu.pipeline_mode<synchronous>, transform_indices = @transform_2, window_bounds = array<i64: 1, 128>}, {pipeline_mode = #tpu.pipeline_mode<synchronous>, transform_indices = @transform_3, window_bounds = array<i64: 128, 128>}, {pipeline_mode = #tpu.pipeline_mode<synchronous>, transform_indices = @transform_4, window_bounds = array<i64: 1, 128>}, {transform_indices = @transform_5, window_bounds = array<i64: 8, 128>}]} {
    %c0 = arith.constant 0 : index
    %c0_0 = arith.constant 0 : index
    %0 = vector.load %arg1[%c0, %c0_0] : memref<8x1000xf32, #tpu.memory_space<vmem>>, vector<8x1000xf32>
    %c0_1 = arith.constant 0 : index
    %c0_2 = arith.constant 0 : index
    %1 = vector.load %arg2[%c0_1, %c0_2] : memref<1000x128xf32, #tpu.memory_space<vmem>>, vector<1000x128xf32>
    %cst = arith.constant dense<0.000000e+00> : vector<8x128xf32>
    %2 = tpu.matmul %0, %1, %cst {dimension_numbers = #tpu.dot_dimension_numbers<[1], [0], [0], [1], [0, 0, 1, 1], [], []>} : vector<8x1000xf32>, vector<1000x128xf32>, vector<8x128xf32> -> vector<8x128xf32>
    %c0_3 = arith.constant 0 : index
    %c0_4 = arith.constant 0 : index
    %3 = vector.load %arg3[%c0_3, %c0_4] : memref<1x128xf32, #tpu.memory_space<vmem>>, vector<1x128xf32>
    %4 = vector.broadcast %3 : vector<1x128xf32> to vector<8x128xf32>
    %5 = arith.addf %2, %4 : vector<8x128xf32>
    %c0_5 = arith.constant 0 : index
    %c0_6 = arith.constant 0 : index
    %6 = vector.load %arg4[%c0_5, %c0_6] : memref<128x128xf32, #tpu.memory_space<vmem>>, vector<128x128xf32>
    %cst_7 = arith.constant dense<0.000000e+00> : vector<8x128xf32>
    %7 = tpu.matmul %5, %6, %cst_7 {dimension_numbers = #tpu.dot_dimension_numbers<[1], [0], [0], [1], [0, 0, 1, 1], [], []>} : vector<8x128xf32>, vector<128x128xf32>, vector<8x128xf32> -> vector<8x128xf32>
    %c0_8 = arith.constant 0 : index
    %c0_9 = arith.constant 0 : index
    %8 = vector.load %arg5[%c0_8, %c0_9] : memref<1x128xf32, #tpu.memory_space<vmem>>, vector<1x128xf32>
    %9 = vector.broadcast %8 : vector<1x128xf32> to vector<8x128xf32>
    %10 = arith.addf %7, %9 : vector<8x128xf32>
    %c0_10 = arith.constant 0 : index
    %c0_11 = arith.constant 0 : index
    %11 = vector.load %arg6[%c0_10, %c0_11] : memref<8x128xf32, #tpu.memory_space<vmem>>, vector<8x128xf32>
    tpu.vector_store %arg6[%c0_10, %c0_11], %10 {strides = array<i32>} : memref<8x128xf32, #tpu.memory_space<vmem>>, vector<8x128xf32>,
    return
  }
  func.func @transform_0(%arg0: i32) -> (i32, i32) {
    %c0_i32 = arith.constant 0 : i32
    %c0_i32_0 = arith.constant 0 : i32
    return %arg0, %c0_i32 : i32, i32
  }
  func.func @transform_1(%arg0: i32) -> (i32, i32) {
    %c0_i32 = arith.constant 0 : i32
    %c0_i32_0 = arith.constant 0 : i32
    %c0_i32_1 = arith.constant 0 : i32
    return %c0_i32, %c0_i32_0 : i32, i32
  }
  func.func @transform_2(%arg0: i32) -> (i32, i32) {
    %c0_i32 = arith.constant 0 : i32
    %c0_i32_0 = arith.constant 0 : i32
    %c0_i32_1 = arith.constant 0 : i32
    return %c0_i32, %c0_i32_0 : i32, i32
  }
  func.func @transform_3(%arg0: i32) -> (i32, i32) {
    %c0_i32 = arith.constant 0 : i32
    %c0_i32_0 = arith.constant 0 : i32
    %c0_i32_1 = arith.constant 0 : i32
    return %c0_i32, %c0_i32_0 : i32, i32
  }
  func.func @transform_4(%arg0: i32) -> (i32, i32) {
    %c0_i32 = arith.constant 0 : i32
    %c0_i32_0 = arith.constant 0 : i32
    %c0_i32_1 = arith.constant 0 : i32
    return %c0_i32, %c0_i32_0 : i32, i32
  }
  func.func @transform_5(%arg0: i32) -> (i32, i32) {
    %c0_i32 = arith.constant 0 : i32
    %c0_i32_0 = arith.constant 0 : i32
    return %arg0, %c0_i32 : i32, i32
  }
}

</mosaic_0001>

<llo_original>
// kernel: mlp_resnet_forward.1
$region0: #{mlp_resnet_forward.1}
  #allocation0 [shape = 'u32[]', space=smem, size = 0x4, offset = 0x4, fixed_abs, tag = 'smem constant byte address 0x4 - core index']
  #allocation1 [shape = 'u32[144,128]{1,0:T(1,128)}', space=vmem, size = 0x12000, scoped, tag = 'internal scratch']
  %s0 = inlined_call_operand.hbm [shape: f32[4,1000], index: 0, kind: input, shape index: {}]
  %s1 = inlined_call_operand.hbm [shape: f32[1000,128], index: 1, kind: input, shape index: {}]
  %s2 = inlined_call_operand.vmem [shape: f32[1,128], index: 2, kind: input, shape index: {}]
  %s3 = inlined_call_operand.hbm [shape: f32[128,128], index: 3, kind: input, shape index: {}]
  %s4 = inlined_call_operand.vmem [shape: f32[1,128], index: 4, kind: input, shape index: {}]
  %s5 = inlined_call_operand.hbm [shape: f32[4,128], index: 5, kind: output, shape index: {}]
  %s6 = sld [smem:[#allocation0]]
  $region42: #{mlp_resnet_forward.1} parent=0
    _
  %s8 = ssub.s32 1, %s6
  %s9 = scalar_select 0, %s8, %s6
  $region1: #{mlp_resnet_forward.1} parent=0
    #allocation2 [shape = 'u8[32768]{0}', space=vmem, size = 0x8000, scoped, tag = 'input window, operand 0, single buffered']
    #allocation3 [shape = 's32[1]{0}', space=sflag, size = 0x4, scoped, tag = 'scoped memory for mlp_resnet_forward.1']
    #allocation4 [shape = 's32[1]{0}', space=sflag, size = 0x4, scoped, tag = 'scoped memory for mlp_resnet_forward.1']
    #allocation5 [shape = 'u8[512000]{0}', space=vmem, size = 0x7d000, scoped, tag = 'input window, operand 1, single buffered']
    #allocation6 [shape = 's32[1]{0}', space=sflag, size = 0x4, scoped, tag = 'scoped memory for mlp_resnet_forward.1']
    #allocation7 [shape = 'u8[65536]{0}', space=vmem, size = 0x10000, scoped, tag = 'input window, operand 3, single buffered']
    #allocation8 [shape = 'u8[4096]{0}', space=vmem, size = 0x1000, scoped, tag = 'output window, operand 0, single buffered']
    %10 = vsyncpa [#allocation3], 0
    %11 = vsyncpa [#allocation6], 0
    %12 = vsyncpa [#allocation4], 0
    // Predicated region
    $region2: #{mlp_resnet_forward.1} parent=1 // pred_check
      _
    $region3: #{mlp_resnet_forward.1} parent=1 // pred_check_branch
      %14 = sbr.rel (0) target = $region5
    $region4: #{mlp_resnet_forward.1} parent=1 // pred_region
      %s16 = ssub.s32 1024, 512
      %17 = vsyncadd [#allocation3], %s16
      %s18 = sshll.u32 [#allocation2], 4
      %s19 = int_to_ptr.vmem [resolvable:$true] %s18
      %24 = dma.hbm_to_vmem [thread:$0]  %s0, 512, %s19, [#allocation3], 512, 512, 32
    $region5: #{mlp_resnet_forward.1} parent=1 // pred_fallthru
      _
    // Predicated region
    $region6: #{mlp_resnet_forward.1} parent=1 // pred_check
      _
    $region7: #{mlp_resnet_forward.1} parent=1 // pred_check_branch
      %26 = sbr.rel (0) target = $region9
    $region8: #{mlp_resnet_forward.1} parent=1 // pred_region
      %s28 = ssub.s32 16000, 16000
      %29 = vsyncadd [#allocation6], %s28
      %s30 = sshll.u32 [#allocation5], 4
      %s31 = int_to_ptr.vmem [resolvable:$true] %s30
      %36 = dma.hbm_to_vmem [thread:$0]  %s1, 16000, %s31, [#allocation6], 128, 128, 8
    $region9: #{mlp_resnet_forward.1} parent=1 // pred_fallthru
      _
    // Predicated region
    $region10: #{mlp_resnet_forward.1} parent=1 // pred_check
      _
    $region11: #{mlp_resnet_forward.1} parent=1 // pred_check_branch
      %38 = sbr.rel (0) target = $region13
    $region12: #{mlp_resnet_forward.1} parent=1 // pred_region
      _
    $region13: #{mlp_resnet_forward.1} parent=1 // pred_fallthru
      _
    // Predicated region
    $region14: #{mlp_resnet_forward.1} parent=1 // pred_check
      _
    $region15: #{mlp_resnet_forward.1} parent=1 // pred_check_branch
      %40 = sbr.rel (0) target = $region17
    $region16: #{mlp_resnet_forward.1} parent=1 // pred_region
      %s42 = ssub.s32 2048, 2048
      %43 = vsyncadd [#allocation6], %s42
      %s44 = sshll.u32 [#allocation7], 4
      %s45 = int_to_ptr.vmem [resolvable:$true] %s44
      %50 = dma.hbm_to_vmem [thread:$0]  %s3, 2048, %s45, [#allocation6], 128, 128, 8
    $region17: #{mlp_resnet_forward.1} parent=1 // pred_fallthru
      _
    // Predicated region
    $region18: #{mlp_resnet_forward.1} parent=1 // pred_check
      _
    $region19: #{mlp_resnet_forward.1} parent=1 // pred_check_branch
      %52 = sbr.rel (0) target = $region21
    $region20: #{mlp_resnet_forward.1} parent=1 // pred_region
      _
    $region21: #{mlp_resnet_forward.1} parent=1 // pred_fallthru
      _
    // Predicated region
    $region22: #{mlp_resnet_forward.1} parent=1 // pred_check
      _
    $region23: #{mlp_resnet_forward.1} parent=1 // pred_check_branch
      %54 = sbr.rel (0) target = $region25
    $region24: #{mlp_resnet_forward.1} parent=1 // pred_region
      %55 = dma.done [#allocation3], 1024
    $region25: #{mlp_resnet_forward.1} parent=1 // pred_fallthru
      _
    // Predicated region
    $region26: #{mlp_resnet_forward.1} parent=1 // pred_check
      _
    $region27: #{mlp_resnet_forward.1} parent=1 // pred_check_branch
      %57 = sbr.rel (0) target = $region29
    $region28: #{mlp_resnet_forward.1} parent=1 // pred_region
      %58 = dma.done [#allocation6], 16000
    $region29: #{mlp_resnet_forward.1} parent=1 // pred_fallthru
      _
    // Predicated region
    $region30: #{mlp_resnet_forward.1} parent=1 // pred_check
      _
    $region31: #{mlp_resnet_forward.1} parent=1 // pred_check_branch
      %60 = sbr.rel (0) target = $region33
    $region32: #{mlp_resnet_forward.1} parent=1 // pred_region
      %61 = dma.done [#allocation6], 2048
    $region33: #{mlp_resnet_forward.1} parent=1 // pred_fallthru
      _
    %v62 = vld [vmem:[#allocation2] sm:$0xff]
    %v63 = vld [vmem:[#allocation2 + $0x8] sm:$0xff]
    %v64 = vld [vmem:[#allocation2 + $0x10] sm:$0xff]
    %v65 = vld [vmem:[#allocation2 + $0x18] sm:$0xff]
    %v66 = vld [vmem:[#allocation2 + $0x20] sm:$0xff]
    %v67 = vld [vmem:[#allocation2 + $0x28] sm:$0xff]
    %v68 = vld [vmem:[#allocation2 + $0x30] sm:$0xff]
    %v69 = vld [vmem:[#allocation2 + $0x38] sm:$0xff]
    %v70 = vld [vmem:[#allocation5] sm:$0xff]
    %v71 = vld [vmem:[#allocation5 + $0x8] sm:$0xff]
    %v72 = vld [vmem:[#allocation5 + $0x10] sm:$0xff]
    %v73 = vld [vmem:[#allocation5 + $0x18] sm:$0xff]
    %v74 = vld [vmem:[#allocation5 + $0x20] sm:$0xff]
    %v75 = vld [vmem:[#allocation5 + $0x28] sm:$0xff]
    %v76 = vld [vmem:[#allocation5 + $0x30] sm:$0xff]
    %v77 = vld [vmem:[#allocation5 + $0x38] sm:$0xff]
    %v78 = vld [vmem:[#allocation5 + $0x40] sm:$0xff]
    %v79 = vld [vmem:[#allocation5 + $0x48] sm:$0xff]
    %v80 = vld [vmem:[#allocation5 + $0x50] sm:$0xff]
    %v81 = vld [vmem:[#allocation5 + $0x58] sm:$0xff]
    %v82 = vld [vmem:[#allocation5 + $0x60] sm:$0xff]
    %v83 = vld [vmem:[#allocation5 + $0x68] sm:$0xff]
    %v84 = vld [vmem:[#allocation5 + $0x70] sm:$0xff]
    %v85 = vld [vmem:[#allocation5 + $0x78] sm:$0xff]
    %v86 = vld [vmem:[#allocation5 + $0x80] sm:$0xff]
    %v87 = vld [vmem:[#allocation5 + $0x88] sm:$0xff]
    %v88 = vld [vmem:[#allocation5 + $0x90] sm:$0xff]
    %v89 = vld [vmem:[#allocation5 + $0x98] sm:$0xff]
    %v90 = vld [vmem:[#allocation5 + $0xa0] sm:$0xff]
    %v91 = vld [vmem:[#allocation5 + $0xa8] sm:$0xff]
    %v92 = vld [vmem:[#allocation5 + $0xb0] sm:$0xff]
    %v93 = vld [vmem:[#allocation5 + $0xb8] sm:$0xff]
    %v94 = vld [vmem:[#allocation5 + $0xc0] sm:$0xff]
    %v95 = vld [vmem:[#allocation5 + $0xc8] sm:$0xff]
    %v96 = vld [vmem:[#allocation5 + $0xd0] sm:$0xff]
    %v97 = vld [vmem:[#allocation5 + $0xd8] sm:$0xff]
    %v98 = vld [vmem:[#allocation5 + $0xe0] sm:$0xff]
    %v99 = vld [vmem:[#allocation5 + $0xe8] sm:$0xff]
    %v100 = vld [vmem:[#allocation5 + $0xf0] sm:$0xff]
    %v101 = vld [vmem:[#allocation5 + $0xf8] sm:$0xff]
    %v102 = vld [vmem:[#allocation5 + $0x100] sm:$0xff]
    %v103 = vld [vmem:[#allocation5 + $0x108] sm:$0xff]
    %v104 = vld [vmem:[#allocation5 + $0x110] sm:$0xff]
    %v105 = vld [vmem:[#allocation5 + $0x118] sm:$0xff]
    %v106 = vld [vmem:[#allocation5 + $0x120] sm:$0xff]
    %v107 = vld [vmem:[#allocation5 + $0x128] sm:$0xff]
    %v108 = vld [vmem:[#allocation5 + $0x130] sm:$0xff]
    %v109 = vld [vmem:[#allocation5 + $0x138] sm:$0xff]
    %v110 = vld [vmem:[#allocation5 + $0x140] sm:$0xff]
    %v111 = vld [vmem:[#allocation5 + $0x148] sm:$0xff]
    %v112 = vld [vmem:[#allocation5 + $0x150] sm:$0xff]
    %v113 = vld [vmem:[#allocation5 + $0x158] sm:$0xff]
    %v114 = vld [vmem:[#allocation5 + $0x160] sm:$0xff]
    %v115 = vld [vmem:[#allocation5 + $0x168] sm:$0xff]
    %v116 = vld [vmem:[#allocation5 + $0x170] sm:$0xff]
    %v117 = vld [vmem:[#allocation5 + $0x178] sm:$0xff]
    %v118 = vld [vmem:[#allocation5 + $0x180] sm:$0xff]
    %v119 = vld [vmem:[#allocation5 + $0x188] sm:$0xff]
    %v120 = vld [vmem:[#allocation5 + $0x190] sm:$0xff]
    %v121 = vld [vmem:[#allocation5 + $0x198] sm:$0xff]
    %v122 = vld [vmem:[#allocation5 + $0x1a0] sm:$0xff]
    %v123 = vld [vmem:[#allocation5 + $0x1a8] sm:$0xff]
    %v124 = vld [vmem:[#allocation5 + $0x1b0] sm:$0xff]
    %v125 = vld [vmem:[#allocation5 + $0x1b8] sm:$0xff]
    %v126 = vld [vmem:[#allocation5 + $0x1c0] sm:$0xff]
    %v127 = vld [vmem:[#allocation5 + $0x1c8] sm:$0xff]
    %v128 = vld [vmem:[#allocation5 + $0x1d0] sm:$0xff]
    %v129 = vld [vmem:[#allocation5 + $0x1d8] sm:$0xff]
    %v130 = vld [vmem:[#allocation5 + $0x1e0] sm:$0xff]
    %v131 = vld [vmem:[#allocation5 + $0x1e8] sm:$0xff]
    %v132 = vld [vmem:[#allocation5 + $0x1f0] sm:$0xff]
    %v133 = vld [vmem:[#allocation5 + $0x1f8] sm:$0xff]
    %v134 = vld [vmem:[#allocation5 + $0x200] sm:$0xff]
    %v135 = vld [vmem:[#allocation5 + $0x208] sm:$0xff]
    %v136 = vld [vmem:[#allocation5 + $0x210] sm:$0xff]
    %v137 = vld [vmem:[#allocation5 + $0x218] sm:$0xff]
    %v138 = vld [vmem:[#allocation5 + $0x220] sm:$0xff]
    %v139 = vld [vmem:[#allocation5 + $0x228] sm:$0xff]
    %v140 = vld [vmem:[#allocation5 + $0x230] sm:$0xff]
    %v141 = vld [vmem:[#allocation5 + $0x238] sm:$0xff]
    %v142 = vld [vmem:[#allocation5 + $0x240] sm:$0xff]
    %v143 = vld [vmem:[#allocation5 + $0x248] sm:$0xff]
    %v144 = vld [vmem:[#allocation5 + $0x250] sm:$0xff]
    %v145 = vld [vmem:[#allocation5 + $0x258] sm:$0xff]
    %v146 = vld [vmem:[#allocation5 + $0x260] sm:$0xff]
    %v147 = vld [vmem:[#allocation5 + $0x268] sm:$0xff]
    %v148 = vld [vmem:[#allocation5 + $0x270] sm:$0xff]
    %v149 = vld [vmem:[#allocation5 + $0x278] sm:$0xff]
    %v150 = vld [vmem:[#allocation5 + $0x280] sm:$0xff]
    %v151 = vld [vmem:[#allocation5 + $0x288] sm:$0xff]
    %v152 = vld [vmem:[#allocation5 + $0x290] sm:$0xff]
    %v153 = vld [vmem:[#allocation5 + $0x298] sm:$0xff]
    %v154 = vld [vmem:[#allocation5 + $0x2a0] sm:$0xff]
    %v155 = vld [vmem:[#allocation5 + $0x2a8] sm:$0xff]
    %v156 = vld [vmem:[#allocation5 + $0x2b0] sm:$0xff]
    %v157 = vld [vmem:[#allocation5 + $0x2b8] sm:$0xff]
    %v158 = vld [vmem:[#allocation5 + $0x2c0] sm:$0xff]
    %v159 = vld [vmem:[#allocation5 + $0x2c8] sm:$0xff]
    %v160 = vld [vmem:[#allocation5 + $0x2d0] sm:$0xff]
    %v161 = vld [vmem:[#allocation5 + $0x2d8] sm:$0xff]
    %v162 = vld [vmem:[#allocation5 + $0x2e0] sm:$0xff]
    %v163 = vld [vmem:[#allocation5 + $0x2e8] sm:$0xff]
    %v164 = vld [vmem:[#allocation5 + $0x2f0] sm:$0xff]
    %v165 = vld [vmem:[#allocation5 + $0x2f8] sm:$0xff]
    %v166 = vld [vmem:[#allocation5 + $0x300] sm:$0xff]
    %v167 = vld [vmem:[#allocation5 + $0x308] sm:$0xff]
    %v168 = vld [vmem:[#allocation5 + $0x310] sm:$0xff]
    %v169 = vld [vmem:[#allocation5 + $0x318] sm:$0xff]
    %v170 = vld [vmem:[#allocation5 + $0x320] sm:$0xff]
    %v171 = vld [vmem:[#allocation5 + $0x328] sm:$0xff]
    %v172 = vld [vmem:[#allocation5 + $0x330] sm:$0xff]
    %v173 = vld [vmem:[#allocation5 + $0x338] sm:$0xff]
    %v174 = vld [vmem:[#allocation5 + $0x340] sm:$0xff]
    %v175 = vld [vmem:[#allocation5 + $0x348] sm:$0xff]
    %v176 = vld [vmem:[#allocation5 + $0x350] sm:$0xff]
    %v177 = vld [vmem:[#allocation5 + $0x358] sm:$0xff]
    %v178 = vld [vmem:[#allocation5 + $0x360] sm:$0xff]
    %v179 = vld [vmem:[#allocation5 + $0x368] sm:$0xff]
    %v180 = vld [vmem:[#allocation5 + $0x370] sm:$0xff]
    %v181 = vld [vmem:[#allocation5 + $0x378] sm:$0xff]
    %v182 = vld [vmem:[#allocation5 + $0x380] sm:$0xff]
    %v183 = vld [vmem:[#allocation5 + $0x388] sm:$0xff]
    %v184 = vld [vmem:[#allocation5 + $0x390] sm:$0xff]
    %v185 = vld [vmem:[#allocation5 + $0x398] sm:$0xff]
    %v186 = vld [vmem:[#allocation5 + $0x3a0] sm:$0xff]
    %v187 = vld [vmem:[#allocation5 + $0x3a8] sm:$0xff]
    %v188 = vld [vmem:[#allocation5 + $0x3b0] sm:$0xff]
    %v189 = vld [vmem:[#allocation5 + $0x3b8] sm:$0xff]
    %v190 = vld [vmem:[#allocation5 + $0x3c0] sm:$0xff]
    %v191 = vld [vmem:[#allocation5 + $0x3c8] sm:$0xff]
    %v192 = vld [vmem:[#allocation5 + $0x3d0] sm:$0xff]
    %v193 = vld [vmem:[#allocation5 + $0x3d8] sm:$0xff]
    %v194 = vld [vmem:[#allocation5 + $0x3e0] sm:$0xff]
    %v195 = vld [vmem:[%s2] sm:$0x1]
    %v197 = vlaneseq
    %v198 = vshrl.u32 %v197, 7
    %v199 = vsub.s32 0, %v198
    %v200 = vrot.slane %v195, %v199
    %v210 = vcombine.low %v62, %v66
    %v211 = vcombine.high %v62, %v66
    %v212 = vcombine.low %v63, %v67
    %v213 = vcombine.high %v63, %v67
    %v214 = vcombine.low %v64, %v68
    %v215 = vcombine.high %v64, %v68
    %v216 = vcombine.low %v65, %v69
    %v217 = vcombine.high %v65, %v69
    %vm225 = vcmask 850944
    %v226 = vsel %vm225, %v217, 0
    %228 = vmatprep.subr.mxu0 0.0
    %229 = vmatpush1.msra.mxu0 %v85
    %230 = vmatprep.subr.mxu0 0.0
    %231 = vmatpush1.msra.mxu0 %v84
    %232 = vmatprep.subr.mxu0 0.0
    %233 = vmatpush1.msra.mxu0 %v83
    %234 = vmatprep.subr.mxu0 0.0
    %235 = vmatpush1.msra.mxu0 %v82
    %236 = vmatprep.subr.mxu0 0.0
    %237 = vmatpush1.msra.mxu0 %v81
    %238 = vmatprep.subr.mxu0 0.0
    %239 = vmatpush1.msra.mxu0 %v80
    %240 = vmatprep.subr.mxu0 0.0
    %241 = vmatpush1.msra.mxu0 %v79
    %242 = vmatprep.subr.mxu0 0.0
    %243 = vmatpush1.msra.mxu0 %v78
    %244 = vmatprep.subr.mxu0 0.0
    %245 = vmatpush1.msra.mxu0 %v77
    %246 = vmatprep.subr.mxu0 0.0
    %247 = vmatpush1.msra.mxu0 %v76
    %248 = vmatprep.subr.mxu0 0.0
    %249 = vmatpush1.msra.mxu0 %v75
    %250 = vmatprep.subr.mxu0 0.0
    %251 = vmatpush1.msra.mxu0 %v74
    %252 = vmatprep.subr.mxu0 0.0
    %253 = vmatpush1.msra.mxu0 %v73
    %254 = vmatprep.subr.mxu0 0.0
    %255 = vmatpush1.msra.mxu0 %v72
    %256 = vmatprep.subr.mxu0 0.0
    %257 = vmatpush1.msra.mxu0 %v71
    %258 = vmatprep.subr.mxu0 0.0
    %259 = vmatpush1.msra.mxu0 %v70
    %260 = vmatprep.subr.mxu0 0.0
    %261 = vmatpush2.msra.mxu0 %v101
    %262 = vmatprep.subr.mxu0 0.0
    %263 = vmatpush2.msra.mxu0 %v100
    %264 = vmatprep.subr.mxu0 0.0
    %265 = vmatpush2.msra.mxu0 %v99
    %266 = vmatprep.subr.mxu0 0.0
    %267 = vmatpush2.msra.mxu0 %v98
    %268 = vmatprep.subr.mxu0 0.0
    %269 = vmatpush2.msra.mxu0 %v97
    %270 = vmatprep.subr.mxu0 0.0
    %271 = vmatpush2.msra.mxu0 %v96
    %272 = vmatprep.subr.mxu0 0.0
    %273 = vmatpush2.msra.mxu0 %v95
    %274 = vmatprep.subr.mxu0 0.0
    %275 = vmatpush2.msra.mxu0 %v94
    %276 = vmatprep.subr.mxu0 0.0
    %277 = vmatpush2.msra.mxu0 %v93
    %278 = vmatprep.subr.mxu0 0.0
    %279 = vmatpush2.msra.mxu0 %v92
    %280 = vmatprep.subr.mxu0 0.0
    %281 = vmatpush2.msra.mxu0 %v91
    %282 = vmatprep.subr.mxu0 0.0
    %283 = vmatpush2.msra.mxu0 %v90
    %284 = vmatprep.subr.mxu0 0.0
    %285 = vmatpush2.msra.mxu0 %v89
    %286 = vmatprep.subr.mxu0 0.0
    %287 = vmatpush2.msra.mxu0 %v88
    %288 = vmatprep.subr.mxu0 0.0
    %289 = vmatpush2.msra.mxu0 %v87
    %290 = vmatprep.subr.mxu0 0.0
    %291 = vmatpush2.msra.mxu0 %v86
    %292 = vmatprep.mubr.f32.mxu0 %v211
    %293 = vmatmul.mubr.f32.gmra.mxu0 %v210
    %v294 = vpop.f32.mrf.mxu0
    %v295 = vadd.f32 %v200, %v294
    %v296 = vpop.f32.mrf.mxu0
    %297 = vdwg.mxu0
    %298 = vmatprep.subr.mxu0 0.0
    %299 = vmatpush1.msra.mxu0 %v117
    %300 = vmatprep.subr.mxu0 0.0
    %301 = vmatpush1.msra.mxu0 %v116
    %302 = vmatprep.subr.mxu0 0.0
    %303 = vmatpush1.msra.mxu0 %v115
    %304 = vmatprep.subr.mxu0 0.0
    %305 = vmatpush1.msra.mxu0 %v114
    %306 = vmatprep.subr.mxu0 0.0
    %307 = vmatpush1.msra.mxu0 %v113
    %308 = vmatprep.subr.mxu0 0.0
    %309 = vmatpush1.msra.mxu0 %v112
    %310 = vmatprep.subr.mxu0 0.0
    %311 = vmatpush1.msra.mxu0 %v111
    %312 = vmatprep.subr.mxu0 0.0
    %313 = vmatpush1.msra.mxu0 %v110
    %314 = vmatprep.subr.mxu0 0.0
    %315 = vmatpush1.msra.mxu0 %v109
    %316 = vmatprep.subr.mxu0 0.0
    %317 = vmatpush1.msra.mxu0 %v108
    %318 = vmatprep.subr.mxu0 0.0
    %319 = vmatpush1.msra.mxu0 %v107
    %320 = vmatprep.subr.mxu0 0.0
    %321 = vmatpush1.msra.mxu0 %v106
    %322 = vmatprep.subr.mxu0 0.0
    %323 = vmatpush1.msra.mxu0 %v105
    %324 = vmatprep.subr.mxu0 0.0
    %325 = vmatpush1.msra.mxu0 %v104
    %326 = vmatprep.subr.mxu0 0.0
    %327 = vmatpush1.msra.mxu0 %v103
    %328 = vmatprep.subr.mxu0 0.0
    %329 = vmatpush1.msra.mxu0 %v102
    %330 = vmatprep.subr.mxu0 0.0
    %331 = vmatpush2.msra.mxu0 %v133
    %332 = vmatprep.subr.mxu0 0.0
    %333 = vmatpush2.msra.mxu0 %v132
    %334 = vmatprep.subr.mxu0 0.0
    %335 = vmatpush2.msra.mxu0 %v131
    %336 = vmatprep.subr.mxu0 0.0
    %337 = vmatpush2.msra.mxu0 %v130
    %338 = vmatprep.subr.mxu0 0.0
    %339 = vmatpush2.msra.mxu0 %v129
    %340 = vmatprep.subr.mxu0 0.0
    %341 = vmatpush2.msra.mxu0 %v128
    %342 = vmatprep.subr.mxu0 0.0
    %343 = vmatpush2.msra.mxu0 %v127
    %344 = vmatprep.subr.mxu0 0.0
    %345 = vmatpush2.msra.mxu0 %v126
    %346 = vmatprep.subr.mxu0 0.0
    %347 = vmatpush2.msra.mxu0 %v125
    %348 = vmatprep.subr.mxu0 0.0
    %349 = vmatpush2.msra.mxu0 %v124
    %350 = vmatprep.subr.mxu0 0.0
    %351 = vmatpush2.msra.mxu0 %v123
    %352 = vmatprep.subr.mxu0 0.0
    %353 = vmatpush2.msra.mxu0 %v122
    %354 = vmatprep.subr.mxu0 0.0
    %355 = vmatpush2.msra.mxu0 %v121
    %356 = vmatprep.subr.mxu0 0.0
    %357 = vmatpush2.msra.mxu0 %v120
    %358 = vmatprep.subr.mxu0 0.0
    %359 = vmatpush2.msra.mxu0 %v119
    %360 = vmatprep.subr.mxu0 0.0
    %361 = vmatpush2.msra.mxu0 %v118
    %362 = vmatprep.mubr.f32.mxu0 %v213
    %363 = vmatmul.mubr.f32.gmra.mxu0 %v212
    %v364 = vpop.f32.mrf.mxu0
    %v365 = vadd.f32 %v295, %v364
    %v366 = vpop.f32.mrf.mxu0
    %367 = vdwg.mxu0
    %368 = vmatprep.subr.mxu0 0.0
    %369 = vmatpush1.msra.mxu0 %v149
    %370 = vmatprep.subr.mxu0 0.0
    %371 = vmatpush1.msra.mxu0 %v148
    %372 = vmatprep.subr.mxu0 0.0
    %373 = vmatpush1.msra.mxu0 %v147
    %374 = vmatprep.subr.mxu0 0.0
    %375 = vmatpush1.msra.mxu0 %v146
    %376 = vmatprep.subr.mxu0 0.0
    %377 = vmatpush1.msra.mxu0 %v145
    %378 = vmatprep.subr.mxu0 0.0
    %379 = vmatpush1.msra.mxu0 %v144
    %380 = vmatprep.subr.mxu0 0.0
    %381 = vmatpush1.msra.mxu0 %v143
    %382 = vmatprep.subr.mxu0 0.0
    %383 = vmatpush1.msra.mxu0 %v142
    %384 = vmatprep.subr.mxu0 0.0
    %385 = vmatpush1.msra.mxu0 %v141
    %386 = vmatprep.subr.mxu0 0.0
    %387 = vmatpush1.msra.mxu0 %v140
    %388 = vmatprep.subr.mxu0 0.0
    %389 = vmatpush1.msra.mxu0 %v139
    %390 = vmatprep.subr.mxu0 0.0
    %391 = vmatpush1.msra.mxu0 %v138
    %392 = vmatprep.subr.mxu0 0.0
    %393 = vmatpush1.msra.mxu0 %v137
    %394 = vmatprep.subr.mxu0 0.0
    %395 = vmatpush1.msra.mxu0 %v136
    %396 = vmatprep.subr.mxu0 0.0
    %397 = vmatpush1.msra.mxu0 %v135
    %398 = vmatprep.subr.mxu0 0.0
    %399 = vmatpush1.msra.mxu0 %v134
    %400 = vmatprep.subr.mxu0 0.0
    %401 = vmatpush2.msra.mxu0 %v165
    %402 = vmatprep.subr.mxu0 0.0
    %403 = vmatpush2.msra.mxu0 %v164
    %404 = vmatprep.subr.mxu0 0.0
    %405 = vmatpush2.msra.mxu0 %v163
    %406 = vmatprep.subr.mxu0 0.0
    %407 = vmatpush2.msra.mxu0 %v162
    %408 = vmatprep.subr.mxu0 0.0
    %409 = vmatpush2.msra.mxu0 %v161
    %410 = vmatprep.subr.mxu0 0.0
    %411 = vmatpush2.msra.mxu0 %v160
    %412 = vmatprep.subr.mxu0 0.0
    %413 = vmatpush2.msra.mxu0 %v159
    %414 = vmatprep.subr.mxu0 0.0
    %415 = vmatpush2.msra.mxu0 %v158
    %416 = vmatprep.subr.mxu0 0.0
    %417 = vmatpush2.msra.mxu0 %v157
    %418 = vmatprep.subr.mxu0 0.0
    %419 = vmatpush2.msra.mxu0 %v156
    %420 = vmatprep.subr.mxu0 0.0
    %421 = vmatpush2.msra.mxu0 %v155
    %422 = vmatprep.subr.mxu0 0.0
    %423 = vmatpush2.msra.mxu0 %v154
    %424 = vmatprep.subr.mxu0 0.0
    %425 = vmatpush2.msra.mxu0 %v153
    %426 = vmatprep.subr.mxu0 0.0
    %427 = vmatpush2.msra.mxu0 %v152
    %428 = vmatprep.subr.mxu0 0.0
    %429 = vmatpush2.msra.mxu0 %v151
    %430 = vmatprep.subr.mxu0 0.0
    %431 = vmatpush2.msra.mxu0 %v150
    %432 = vmatprep.mubr.f32.mxu0 %v215
    %433 = vmatmul.mubr.f32.gmra.mxu0 %v214
    %v434 = vpop.f32.mrf.mxu0
    %v435 = vadd.f32 %v365, %v434
    %v436 = vpop.f32.mrf.mxu0
    %437 = vdwg.mxu0
    %438 = vmatprep.subr.mxu0 0.0
    %439 = vmatpush1.msra.mxu0 %v181
    %440 = vmatprep.subr.mxu0 0.0
    %441 = vmatpush1.msra.mxu0 %v180
    %442 = vmatprep.subr.mxu0 0.0
    %443 = vmatpush1.msra.mxu0 %v179
    %444 = vmatprep.subr.mxu0 0.0
    %445 = vmatpush1.msra.mxu0 %v178
    %446 = vmatprep.subr.mxu0 0.0
    %447 = vmatpush1.msra.mxu0 %v177
    %448 = vmatprep.subr.mxu0 0.0
    %449 = vmatpush1.msra.mxu0 %v176
    %450 = vmatprep.subr.mxu0 0.0
    %451 = vmatpush1.msra.mxu0 %v175
    %452 = vmatprep.subr.mxu0 0.0
    %453 = vmatpush1.msra.mxu0 %v174
    %454 = vmatprep.subr.mxu0 0.0
    %455 = vmatpush1.msra.mxu0 %v173
    %456 = vmatprep.subr.mxu0 0.0
    %457 = vmatpush1.msra.mxu0 %v172
    %458 = vmatprep.subr.mxu0 0.0
    %459 = vmatpush1.msra.mxu0 %v171
    %460 = vmatprep.subr.mxu0 0.0
    %461 = vmatpush1.msra.mxu0 %v170
    %462 = vmatprep.subr.mxu0 0.0
    %463 = vmatpush1.msra.mxu0 %v169
    %464 = vmatprep.subr.mxu0 0.0
    %465 = vmatpush1.msra.mxu0 %v168
    %466 = vmatprep.subr.mxu0 0.0
    %467 = vmatpush1.msra.mxu0 %v167
    %468 = vmatprep.subr.mxu0 0.0
    %469 = vmatpush1.msra.mxu0 %v166
    %470 = vmatprep.subr.mxu0 0.0
    %471 = vmatpush2.msra.mxu0 0.0
    %472 = vmatprep.subr.mxu0 0.0
    %473 = vmatpush2.msra.mxu0 0.0
    %474 = vmatprep.subr.mxu0 0.0
    %475 = vmatpush2.msra.mxu0 0.0
    %476 = vmatprep.subr.mxu0 0.0
    %477 = vmatpush2.msra.mxu0 %v194
    %478 = vmatprep.subr.mxu0 0.0
    %479 = vmatpush2.msra.mxu0 %v193
    %480 = vmatprep.subr.mxu0 0.0
    %481 = vmatpush2.msra.mxu0 %v192
    %482 = vmatprep.subr.mxu0 0.0
    %483 = vmatpush2.msra.mxu0 %v191
    %484 = vmatprep.subr.mxu0 0.0
    %485 = vmatpush2.msra.mxu0 %v190
    %486 = vmatprep.subr.mxu0 0.0
    %487 = vmatpush2.msra.mxu0 %v189
    %488 = vmatprep.subr.mxu0 0.0
    %489 = vmatpush2.msra.mxu0 %v188
    %490 = vmatprep.subr.mxu0 0.0
    %491 = vmatpush2.msra.mxu0 %v187
    %492 = vmatprep.subr.mxu0 0.0
    %493 = vmatpush2.msra.mxu0 %v186
    %494 = vmatprep.subr.mxu0 0.0
    %495 = vmatpush2.msra.mxu0 %v185
    %496 = vmatprep.subr.mxu0 0.0
    %497 = vmatpush2.msra.mxu0 %v184
    %498 = vmatprep.subr.mxu0 0.0
    %499 = vmatpush2.msra.mxu0 %v183
    %500 = vmatprep.subr.mxu0 0.0
    %501 = vmatpush2.msra.mxu0 %v182
    %502 = vmatprep.mubr.f32.mxu0 %v226
    %503 = vmatmul.mubr.f32.gmra.mxu0 %v216
    %v504 = vpop.f32.mrf.mxu0
    %v505 = vadd.f32 %v435, %v504
    %v506 = vpop.f32.mrf.mxu0
    %507 = vdwg.mxu0
    %v508 = vld [vmem:[#allocation7] sm:$0xff]
    %v509 = vld [vmem:[#allocation7 + $0x8] sm:$0xff]
    %v510 = vld [vmem:[#allocation7 + $0x10] sm:$0xff]
    %v511 = vld [vmem:[#allocation7 + $0x18] sm:$0xff]
    %v512 = vld [vmem:[#allocation7 + $0x20] sm:$0xff]
    %v513 = vld [vmem:[#allocation7 + $0x28] sm:$0xff]
    %v514 = vld [vmem:[#allocation7 + $0x30] sm:$0xff]
    %v515 = vld [vmem:[#allocation7 + $0x38] sm:$0xff]
    %v516 = vld [vmem:[#allocation7 + $0x40] sm:$0xff]
    %v517 = vld [vmem:[#allocation7 + $0x48] sm:$0xff]
    %v518 = vld [vmem:[#allocation7 + $0x50] sm:$0xff]
    %v519 = vld [vmem:[#allocation7 + $0x58] sm:$0xff]
    %v520 = vld [vmem:[#allocation7 + $0x60] sm:$0xff]
    %v521 = vld [vmem:[#allocation7 + $0x68] sm:$0xff]
    %v522 = vld [vmem:[#allocation7 + $0x70] sm:$0xff]
    %v523 = vld [vmem:[#allocation7 + $0x78] sm:$0xff]
    %v524 = vld [vmem:[%s4] sm:$0x1]
    %v526 = vlaneseq
    %v527 = vshrl.u32 %v526, 7
    %v528 = vsub.s32 0, %v527
    %v529 = vrot.slane %v524, %v528
    %531 = vmatprep.subr.mxu0 0.0
    %532 = vmatpush1.msra.mxu0 %v523
    %533 = vmatprep.subr.mxu0 0.0
    %534 = vmatpush1.msra.mxu0 %v522
    %535 = vmatprep.subr.mxu0 0.0
    %536 = vmatpush1.msra.mxu0 %v521
    %537 = vmatprep.subr.mxu0 0.0
    %538 = vmatpush1.msra.mxu0 %v520
    %539 = vmatprep.subr.mxu0 0.0
    %540 = vmatpush1.msra.mxu0 %v519
    %541 = vmatprep.subr.mxu0 0.0
    %542 = vmatpush1.msra.mxu0 %v518
    %543 = vmatprep.subr.mxu0 0.0
    %544 = vmatpush1.msra.mxu0 %v517
    %545 = vmatprep.subr.mxu0 0.0
    %546 = vmatpush1.msra.mxu0 %v516
    %547 = vmatprep.subr.mxu0 0.0
    %548 = vmatpush1.msra.mxu0 %v515
    %549 = vmatprep.subr.mxu0 0.0
    %550 = vmatpush1.msra.mxu0 %v514
    %551 = vmatprep.subr.mxu0 0.0
    %552 = vmatpush1.msra.mxu0 %v513
    %553 = vmatprep.subr.mxu0 0.0
    %554 = vmatpush1.msra.mxu0 %v512
    %555 = vmatprep.subr.mxu0 0.0
    %556 = vmatpush1.msra.mxu0 %v511
    %557 = vmatprep.subr.mxu0 0.0
    %558 = vmatpush1.msra.mxu0 %v510
    %559 = vmatprep.subr.mxu0 0.0
    %560 = vmatpush1.msra.mxu0 %v509
    %561 = vmatprep.subr.mxu0 0.0
    %562 = vmatpush1.msra.mxu0 %v508
    %563 = vmatprep.subr.mxu0 0.0
    %564 = vmatpush2.msra.mxu0 0.0
    %565 = vmatprep.subr.mxu0 0.0
    %566 = vmatpush2.msra.mxu0 0.0
    %567 = vmatprep.subr.mxu0 0.0
    %568 = vmatpush2.msra.mxu0 0.0
    %569 = vmatprep.subr.mxu0 0.0
    %570 = vmatpush2.msra.mxu0 0.0
    %571 = vmatprep.subr.mxu0 0.0
    %572 = vmatpush2.msra.mxu0 0.0
    %573 = vmatprep.subr.mxu0 0.0
    %574 = vmatpush2.msra.mxu0 0.0
    %575 = vmatprep.subr.mxu0 0.0
    %576 = vmatpush2.msra.mxu0 0.0
    %577 = vmatprep.subr.mxu0 0.0
    %578 = vmatpush2.msra.mxu0 0.0
    %579 = vmatprep.subr.mxu0 0.0
    %580 = vmatpush2.msra.mxu0 0.0
    %581 = vmatprep.subr.mxu0 0.0
    %582 = vmatpush2.msra.mxu0 0.0
    %583 = vmatprep.subr.mxu0 0.0
    %584 = vmatpush2.msra.mxu0 0.0
    %585 = vmatprep.subr.mxu0 0.0
    %586 = vmatpush2.msra.mxu0 0.0
    %587 = vmatprep.subr.mxu0 0.0
    %588 = vmatpush2.msra.mxu0 0.0
    %589 = vmatprep.subr.mxu0 0.0
    %590 = vmatpush2.msra.mxu0 0.0
    %591 = vmatprep.subr.mxu0 0.0
    %592 = vmatpush2.msra.mxu0 0.0
    %593 = vmatprep.subr.mxu0 0.0
    %594 = vmatpush2.msra.mxu0 0.0
    %595 = vmatprep.mubr.f32.mxu0 0.0
    %596 = vmatmul.mubr.f32.gmra.mxu0 %v505
    %v597 = vpop.f32.mrf.mxu0
    %v598 = vadd.f32 %v529, %v597
    %v599 = vpop.f32.mrf.mxu0
    %600 = vdwg.mxu0
    %601 = vst [vmem:[#allocation8] sm:$0xff] %v598
    // Predicated region
    $region34: #{mlp_resnet_forward.1} parent=1 // pred_check
      _
    $region35: #{mlp_resnet_forward.1} parent=1 // pred_check_branch
      %603 = sbr.rel (0) target = $region37
    $region36: #{mlp_resnet_forward.1} parent=1 // pred_region
      %s605 = ssub.s32 128, 64
      %606 = vsyncadd [#allocation4], %s605
      %s607 = sshll.u32 [#allocation8], 4
      %s608 = int_to_ptr.vmem [resolvable:$true] %s607
      %613 = dma.vmem_to_hbm [thread:$0]  %s608, 64, %s5, [#allocation4], 64, 64, 4
    $region37: #{mlp_resnet_forward.1} parent=1 // pred_fallthru
      _
    // Predicated region
    $region38: #{mlp_resnet_forward.1} parent=1 // pred_check
      _
    $region39: #{mlp_resnet_forward.1} parent=1 // pred_check_branch
      %615 = sbr.rel (0) target = $region41
    $region40: #{mlp_resnet_forward.1} parent=1 // pred_region
      %616 = dma.done [#allocation4], 128
    $region41: #{mlp_resnet_forward.1} parent=1 // pred_fallthru
      _
    %617 = vsyncpa [#allocation3], 1
    %618 = vsyncpa [#allocation6], 1
    %619 = vsyncpa [#allocation4], 1

</llo_original>
